<compile_context>
chip_gen: v6e
topology: v6e:2x2x1
jax: 0.10.0
libtpu: 0.0.40
codegen_flags: <defaults>
</compile_context>

<pallas_src>
import jax
import jax.numpy as jnp
from jax.experimental import pallas as pl
from jax.experimental.pallas import tpu as pltpu


# ----------------------------------------------------------------------------- Pallas kernels

def _pick_tm(M):
    for d in (1024, 512, 256, 128, 64, 32, 16):
        if M % d == 0:
            return min(d, M)
    return M


def pallas_branch_a(cols, w_dcn, s_dcn, b_dcn, w_c1, s_c1, b_c1, tm):
    """Fused (loc+cls):  h = SiLU(BN(cols @ W_dcn)) ;  out = LeakyReLU(BN(h @ W_c1)).
    cols:(M,K) bf16, weights bf16, scale/shift f32.  Returns (M, N2) bf16."""
    M, K = cols.shape
    N1 = w_dcn.shape[1]
    N2 = w_c1.shape[1]
    assert M % tm == 0

    def kernel(c_ref, w1_ref, s1_ref, b1_ref, w2_ref, s2_ref, b2_ref, o_ref):
        h = jnp.dot(c_ref[...], w1_ref[...], preferred_element_type=jnp.float32)
        h = h * s1_ref[...] + b1_ref[...]          # folded BatchNorm (f32)
        h = h * jax.nn.sigmoid(h)                  # SiLU
        y = jnp.dot(h.astype(jnp.bfloat16), w2_ref[...],
                    preferred_element_type=jnp.float32)
        y = y * s2_ref[...] + b2_ref[...]          # folded BatchNorm (f32)
        y = jnp.where(y > 0, y, 0.1 * y)           # LeakyReLU(0.1)
        o_ref[...] = y.astype(o_ref.dtype)

    const = lambda i: (0, 0)
    return pl.pallas_call(
        kernel,
        out_shape=jax.ShapeDtypeStruct((M, N2), jnp.bfloat16),
        grid=(M // tm,),
        in_specs=[pl.BlockSpec((tm, K), lambda i: (i, 0)),
                  pl.BlockSpec((K, N1), const),
                  pl.BlockSpec((1, N1), const),
                  pl.BlockSpec((1, N1), const),
                  pl.BlockSpec((N1, N2), const),
                  pl.BlockSpec((1, N2), const),
                  pl.BlockSpec((1, N2), const)],
        out_specs=pl.BlockSpec((tm, N2), lambda i: (i, 0)),
        compiler_params=pltpu.CompilerParams(dimension_semantics=("parallel",)),
    )(cols, w_dcn, s_dcn, b_dcn, w_c1, s_c1, b_c1)


def pallas_branch_b(cols, out1_flat, grid_flat, w_c2, s_c2, b_c2, w_c3, b_c3,
                    stride, nC, tm):
    """Fused (loc+cls): h = LeakyReLU(BN(cols @ W_c2)); out2 = h @ W_c3 + b; decode(out2).
    Returns (out2_flat (M, 9+nC+1) f32,  out2_de (M, 14+nC) f32)."""
    M, K = cols.shape
    N1 = w_c2.shape[1]
    N2 = w_c3.shape[1]
    C1 = out1_flat.shape[1]
    Co = 14 + nC
    s = float(stride)
    assert M % tm == 0

    def kernel(c_ref, o1_ref, g_ref, w1_ref, s1_ref, b1_ref, w2_ref, b2_ref,
               o2_ref, de_ref):
        h = jnp.dot(c_ref[...], w1_ref[...], preferred_element_type=jnp.float32)
        h = h * s1_ref[...] + b1_ref[...]
        h = jnp.where(h > 0, h, 0.1 * h)           # LeakyReLU(0.1)
        o2 = jnp.dot(h.astype(jnp.bfloat16), w2_ref[...],
                     preferred_element_type=jnp.float32) + b2_ref[...]
        o2_ref[...] = o2

        # ---- box decode (eval mode), fused epilogue; grouped column stores ----
        o1 = o1_ref[...]
        g = g_ref[...]
        pred_l = jnp.exp(o2[:, 0:4]) * o1[:, 9:13]
        cx = g[:, 0:1] * s + s * 0.5
        cy = g[:, 1:2] * s + s * 0.5
        de_ref[:, 0:1] = cx + 0.5 * (pred_l[:, 1:2] - pred_l[:, 3:4])   # px
        de_ref[:, 1:2] = cy + 0.5 * (pred_l[:, 2:3] - pred_l[:, 0:1])   # py
        de_ref[:, 2:3] = pred_l[:, 1:2] + pred_l[:, 3:4]                # pw
        de_ref[:, 3:4] = pred_l[:, 0:1] + pred_l[:, 2:3]                # ph
        sig = jax.nn.sigmoid(o2[:, 4:])            # [s(4), r(1), conf(1), prob(nC)]
        pred_r = sig[:, 4:5]
        maskr = jnp.where(pred_r > 0.9, 0.0, 1.0)
        de_ref[:, 4:8] = sig[:, 0:4] * maskr                            # pred_s
        de_ref[:, 8:9] = pred_r                                         # pred_r
        de_ref[:, 9:13] = pred_l                                        # pred_l
        de_ref[:, 13:] = sig[:, 5:]                                     # conf + prob

    const = lambda i: (0, 0)
    return pl.pallas_call(
        kernel,
        out_shape=(jax.ShapeDtypeStruct((M, N2), jnp.float32),
                   jax.ShapeDtypeStruct((M, Co), jnp.float32)),
        grid=(M // tm,),
        in_specs=[pl.BlockSpec((tm, K), lambda i: (i, 0)),
                  pl.BlockSpec((tm, C1), lambda i: (i, 0)),
                  pl.BlockSpec((tm, 2), lambda i: (i, 0)),
                  pl.BlockSpec((K, N1), const),
                  pl.BlockSpec((1, N1), const),
                  pl.BlockSpec((1, N1), const),
                  pl.BlockSpec((N1, N2), const),
                  pl.BlockSpec((1, N2), const)],
        out_specs=(pl.BlockSpec((tm, N2), lambda i: (i, 0)),
                   pl.BlockSpec((tm, Co), lambda i: (i, 0))),
        compiler_params=pltpu.CompilerParams(dimension_semantics=("parallel",)),
    )(cols, out1_flat, grid_flat, w_c2, s_c2, b_c2, w_c3, b_c3)


# ----------------------------------------------------------------------------- JAX glue

def deform_cols_nhwc(x_nhwc, offsets, mask, tap_weight=None):
    """Modulated deformable 3x3 (stride 1, pad 1) im2col, NHWC end-to-end.
    x_nhwc:(B,H,W,C)  offsets:(B,18,H,W) as (dy,dx) per tap (row-major taps)
    mask:(B,9,H,W)  tap_weight optional (B,9,H,W).
    Returns (B*H*W, 9*C) with TAP-major / channel-minor columns (pair with conv_w_tapmajor).
    No large layout transpose is materialized (only the small offset/mask tensors)."""
    B, H, W, C = x_nhwc.shape
    ky = jnp.array([-1, -1, -1, 0, 0, 0, 1, 1, 1], jnp.float32)
    kx = jnp.array([-1, 0, 1, -1, 0, 1, -1, 0, 1], jnp.float32)
    off = offsets.reshape(B, 9, 2, H, W)
    dy = off[:, :, 0].transpose(0, 2, 3, 1)            # (B,H,W,9)
    dx = off[:, :, 1].transpose(0, 2, 3, 1)
    m = mask.transpose(0, 2, 3, 1)
    if tap_weight is not None:
        m = m * tap_weight.transpose(0, 2, 3, 1)

    base_y = jnp.arange(H, dtype=jnp.float32)[None, :, None, None]
    base_x = jnp.arange(W, dtype=jnp.float32)[None, None, :, None]
    py = base_y + ky[None, None, None, :] + dy         # (B,H,W,9)
    px = base_x + kx[None, None, None, :] + dx
    y0 = jnp.floor(py)
    x0 = jnp.floor(px)
    wy1 = py - y0
    wy0 = 1.0 - wy1
    wx1 = px - x0
    wx0 = 1.0 - wx1

    x_flat = x_nhwc.reshape(B, H * W, C)

    def corner(iy, ix, w):
        valid = ((iy >= 0) & (iy <= H - 1) & (ix >= 0) & (ix <= W - 1)).astype(x_nhwc.dtype)
        iyc = jnp.clip(iy, 0, H - 1).astype(jnp.int32)
        ixc = jnp.clip(ix, 0, W - 1).astype(jnp.int32)
        idx = (iyc * W + ixc).reshape(B, H * W * 9)
        g = jnp.take_along_axis(x_flat, idx[:, :, None], axis=1)   # (B, H*W*9, C)
        return g * (w * valid).reshape(B, H * W * 9, 1)

    val = (corner(y0, x0, wy0 * wx0) + corner(y0, x0 + 1.0, wy0 * wx1)
           + corner(y0 + 1.0, x0, wy1 * wx0) + corner(y0 + 1.0, x0 + 1.0, wy1 * wx1))
    val = val * m.reshape(B, H * W * 9, 1)
    return val.reshape(B * H * W, 9 * C)


def im2col_3x3_tapmajor(x_nhwc):
    """Standard 3x3, stride 1, pad 1 im2col on NHWC.  Tap-major columns: (B*H*W, 9*C)."""
    B, H, W, C = x_nhwc.shape
    xp = jnp.pad(x_nhwc, ((0, 0), (1, 1), (1, 1), (0, 0)))
    cols = jnp.concatenate([xp[:, i:i + H, j:j + W, :]
                            for i in range(3) for j in range(3)], axis=-1)
    return cols.reshape(B * H * W, 9 * C)


def conv_w_tapmajor(wt):
    """(C_out, C_in, kh, kw) -> (kh*kw*C_in, C_out)  (tap-major / channel-minor rows)."""
    return jnp.transpose(wt, (2, 3, 1, 0)).reshape(-1, wt.shape[0])


def block_diag2(a, b):
    ka, na = a.shape
    kb, nb = b.shape
    out = jnp.zeros((ka + kb, na + nb), a.dtype)
    out = out.at[:ka, :na].set(a)
    out = out.at[ka:, na:].set(b)
    return out


def bn_fold(bn_params, conv_bias=None, eps=1e-5):
    gamma, beta, mean, var = bn_params
    scale = gamma / jnp.sqrt(var + eps)
    b = conv_bias if conv_bias is not None else jnp.zeros_like(mean)
    shift = beta + scale * (b - mean)
    return scale.reshape(1, -1), shift.reshape(1, -1)


def init_params(key, fi, nC):
    ks = jax.random.split(key, 20)

    def w(k, shape, scale=0.05):
        return scale * jax.random.normal(k, shape, jnp.float32)

    def bn(k, c):
        k1, k2, k3, k4 = jax.random.split(k, 4)
        return (1.0 + 0.1 * jax.random.normal(k1, (c,), jnp.float32),
                0.05 * jax.random.normal(k2, (c,), jnp.float32),
                0.05 * jax.random.normal(k3, (c,), jnp.float32),
                1.0 + 0.1 * jax.random.uniform(k4, (c,), jnp.float32))

    p = {}
    p['dcn_loc_w'] = w(ks[0], (2 * fi, fi + 2, 3, 3)); p['dcn_loc_b'] = w(ks[1], (2 * fi,))
    p['bn_loc'] = bn(ks[2], 2 * fi)
    p['loc_c1_w'] = w(ks[3], (fi, 2 * fi, 1, 1));       p['loc_c1_bn'] = bn(ks[4], fi)
    p['loc_c2_w'] = w(ks[5], (2 * fi, fi, 3, 3));       p['loc_c2_bn'] = bn(ks[6], 2 * fi)
    p['loc_c3_w'] = w(ks[7], (9, 2 * fi, 1, 1));        p['loc_c3_b'] = w(ks[8], (9,))
    p['dcn_cls_w'] = w(ks[9], (2 * fi, fi, 3, 3));      p['dcn_cls_b'] = w(ks[10], (2 * fi,))
    p['bn_cls'] = bn(ks[11], 2 * fi)
    p['cls_c1_w'] = w(ks[12], (fi, 2 * fi, 1, 1));      p['cls_c1_bn'] = bn(ks[13], fi)
    p['cls_c2_w'] = w(ks[14], (2 * fi, fi, 3, 3));      p['cls_c2_bn'] = bn(ks[15], 2 * fi)
    p['cls_c3_w'] = w(ks[16], (nC + 1, 2 * fi, 1, 1));  p['cls_c3_b'] = w(ks[17], (nC + 1,))
    return p


# ----------------------------------------------------------------------------- Head2 forward (eval mode)

def head2_forward(params, out1, loc, cls, offsets_loc, offsets_cls,
                  mask_loc, mask_cls, w_c8, nC, stride):
    B, S, _, C1 = out1.shape
    fi = loc.shape[1]
    M = B * S * S
    p = params
    tm = _pick_tm(M)

    # ---- attention gate: loc*sigmoid(att)+loc (plain JAX, fuses into layout ops) ----
    g = 1.0 + jax.nn.sigmoid(out1[:, :, :, 9:10])                   # (B,S,S,1)
    loc_nhwc = loc.transpose(0, 2, 3, 1) * g                        # (B,S,S,fi)
    cls_nhwc = cls.transpose(0, 2, 3, 1) * g

    # ---- grid channels: ch0 = x (col), ch1 = y (row) ----
    xs = jnp.broadcast_to(jnp.arange(S, dtype=jnp.float32)[None, :], (S, S))
    ys = jnp.broadcast_to(jnp.arange(S, dtype=jnp.float32)[:, None], (S, S))
    grid_nhwc = jnp.broadcast_to(jnp.stack([xs, ys], axis=-1)[None], (B, S, S, 2))

    # ---- deformable im2col for both branches, concatenated along K ----
    dcn_loc_in = jnp.concatenate([loc_nhwc, grid_nhwc], axis=-1)    # (B,S,S,fi+2)
    cols_loc = deform_cols_nhwc(dcn_loc_in, offsets_loc, mask_loc)  # (M, 9*(fi+2))
    # TODO(synk): DCNv2_Circle8 internals not provided; w_c8 weights the 8 ring taps, center=1.
    ones_c = jnp.ones((B, 1, S, S), jnp.float32)
    tapw = jnp.concatenate([w_c8[:, :4], ones_c, w_c8[:, 4:]], axis=1)   # (B,9,S,S)
    cols_cls = deform_cols_nhwc(cls_nhwc, offsets_cls, mask_cls, tap_weight=tapw)
    cols_a = jnp.concatenate([cols_loc, cols_cls], axis=-1).astype(jnp.bfloat16)

    # ---- fold weights / BN once (loc & cls concatenated: block-diag along K/N) ----
    w_dcn = block_diag2(conv_w_tapmajor(p['dcn_loc_w']),
                        conv_w_tapmajor(p['dcn_cls_w'])).astype(jnp.bfloat16)
    sc_l, sh_l = bn_fold(p['bn_loc'], conv_bias=p['dcn_loc_b'])
    sc_c, sh_c = bn_fold(p['bn_cls'], conv_bias=p['dcn_cls_b'])
    s_dcn = jnp.concatenate([sc_l, sc_c], axis=-1)
    b_dcn = jnp.concatenate([sh_l, sh_c], axis=-1)

    w_c1 = block_diag2(conv_w_tapmajor(p['loc_c1_w']),
                       conv_w_tapmajor(p['cls_c1_w'])).astype(jnp.bfloat16)
    sc_l, sh_l = bn_fold(p['loc_c1_bn'])
    sc_c, sh_c = bn_fold(p['cls_c1_bn'])
    s_c1 = jnp.concatenate([sc_l, sc_c], axis=-1)
    b_c1 = jnp.concatenate([sh_l, sh_c], axis=-1)

    # ---- Pallas kernel A: DCN-GEMM+BN+SiLU -> 1x1+BN+Leaky (both branches) ----
    x1y1 = pallas_branch_a(cols_a, w_dcn, s_dcn, b_dcn, w_c1, s_c1, b_c1, tm=tm)  # (M, 2fi) bf16

    # ---- 3x3 im2col of the combined [loc_c1 | cls_c1] activations ----
    cols_b = im2col_3x3_tapmajor(x1y1.reshape(B, S, S, 2 * fi))     # (M, 9*2fi) bf16

    # combined 3x3 conv weight: block structure over (Cout, Cin), tap layout handled by helper
    w_c2_conv = jnp.zeros((4 * fi, 2 * fi, 3, 3), jnp.float32)
    w_c2_conv = w_c2_conv.at[:2 * fi, :fi].set(p['loc_c2_w'])
    w_c2_conv = w_c2_conv.at[2 * fi:, fi:].set(p['cls_c2_w'])
    w_c2 = conv_w_tapmajor(w_c2_conv).astype(jnp.bfloat16)
    sc_l, sh_l = bn_fold(p['loc_c2_bn'])
    sc_c, sh_c = bn_fold(p['cls_c2_bn'])
    s_c2 = jnp.concatenate([sc_l, sc_c], axis=-1)
    b_c2 = jnp.concatenate([sh_l, sh_c], axis=-1)

    w_c3 = block_diag2(conv_w_tapmajor(p['loc_c3_w']),
                       conv_w_tapmajor(p['cls_c3_w'])).astype(jnp.bfloat16)
    b_c3 = jnp.concatenate([p['loc_c3_b'], p['cls_c3_b']]).reshape(1, -1)

    grid_flat = jnp.broadcast_to(jnp.stack([xs, ys], axis=-1).reshape(1, S * S, 2),
                                 (B, S * S, 2)).reshape(M, 2)
    out1_flat = out1.reshape(M, C1)

    # ---- Pallas kernel B: 3x3-GEMM+BN+Leaky -> 1x1+bias -> fused box decode ----
    out2_flat, out2_de = pallas_branch_b(cols_b, out1_flat, grid_flat,
                                         w_c2, s_c2, b_c2, w_c3, b_c3,
                                         stride, nC, tm=tm)
    out2 = out2_flat.reshape(B, S, S, 9 + nC + 1)
    return out2, out2_de


# ----------------------------------------------------------------------------- main

if __name__ == "__main__":
    B, S = 2, 8            # batch, output_size (H == W)
    fi, nC, stride = 8, 4, 4

    key = jax.random.PRNGKey(0)
    kk = jax.random.split(key, 10)
    out1 = 0.5 * jax.random.normal(kk[0], (B, S, S, 9 + nC + 1), jnp.float32)
    loc = jax.random.normal(kk[1], (B, fi, S, S), jnp.float32)
    cls = jax.random.normal(kk[2], (B, fi, S, S), jnp.float32)
    offsets_loc = 0.5 * jax.random.normal(kk[3], (B, 18, S, S), jnp.float32)
    offsets_cls = 0.5 * jax.random.normal(kk[4], (B, 18, S, S), jnp.float32)
    mask_loc = jax.nn.sigmoid(jax.random.normal(kk[5], (B, 9, S, S), jnp.float32))
    mask_cls = jax.nn.sigmoid(jax.random.normal(kk[6], (B, 9, S, S), jnp.float32))
    w_c8 = jax.nn.sigmoid(jax.random.normal(kk[7], (B, 8, S, S), jnp.float32))
    params = init_params(kk[8], fi, nC)

    out2, out2_de = head2_forward(params, out1, loc, cls, offsets_loc, offsets_cls,
                                  mask_loc, mask_cls, w_c8, nC, stride)
    jax.block_until_ready((out2, out2_de))

    assert out2.shape == (B, S, S, 9 + nC + 1)
    assert out2_de.shape == (B * S * S, 14 + nC)
    assert bool(jnp.all(jnp.isfinite(out2))) and bool(jnp.all(jnp.isfinite(out2_de)))
    print("KERNEL_OK")
</pallas_src>

<mosaic_0001>
module attributes {stable_mosaic.version = 11 : i64} {
  func.func @kernel(%arg0: i32, %arg1: memref<128x162xbf16, #tpu.memory_space<vmem>>, %arg2: memref<162x32xbf16, #tpu.memory_space<vmem>>, %arg3: memref<1x32xf32, #tpu.memory_space<vmem>>, %arg4: memref<1x32xf32, #tpu.memory_space<vmem>>, %arg5: memref<32x16xbf16, #tpu.memory_space<vmem>>, %arg6: memref<1x16xf32, #tpu.memory_space<vmem>>, %arg7: memref<1x16xf32, #tpu.memory_space<vmem>>, %arg8: memref<128x16xbf16, #tpu.memory_space<vmem>>) attributes {dimension_semantics = [#tpu.dimension_semantics<parallel>], iteration_bounds = array<i64: 1>, scalar_prefetch = 0 : i64, scratch_operands = 0 : i64, tpu.core_type = #tpu.core_type<tc>, window_params = [{transform_indices = @transform_0, window_bounds = array<i64: 128, 162>}, {pipeline_mode = #tpu.pipeline_mode<synchronous>, transform_indices = @transform_1, window_bounds = array<i64: 162, 32>}, {pipeline_mode = #tpu.pipeline_mode<synchronous>, transform_indices = @transform_2, window_bounds = array<i64: 1, 32>}, {pipeline_mode = #tpu.pipeline_mode<synchronous>, transform_indices = @transform_3, window_bounds = array<i64: 1, 32>}, {pipeline_mode = #tpu.pipeline_mode<synchronous>, transform_indices = @transform_4, window_bounds = array<i64: 32, 16>}, {pipeline_mode = #tpu.pipeline_mode<synchronous>, transform_indices = @transform_5, window_bounds = array<i64: 1, 16>}, {pipeline_mode = #tpu.pipeline_mode<synchronous>, transform_indices = @transform_6, window_bounds = array<i64: 1, 16>}, {transform_indices = @transform_7, window_bounds = array<i64: 128, 16>}]} {
    %c0 = arith.constant 0 : index
    %c0_0 = arith.constant 0 : index
    %0 = vector.load %arg1[%c0, %c0_0] : memref<128x162xbf16, #tpu.memory_space<vmem>>, vector<128x162xbf16>
    %c0_1 = arith.constant 0 : index
    %c0_2 = arith.constant 0 : index
    %1 = vector.load %arg2[%c0_1, %c0_2] : memref<162x32xbf16, #tpu.memory_space<vmem>>, vector<162x32xbf16>
    %cst = arith.constant dense<0.000000e+00> : vector<128x32xf32>
    %2 = tpu.matmul %0, %1, %cst {dimension_numbers = #tpu.dot_dimension_numbers<[1], [0], [0], [1], [0, 0, 1, 1], [], []>} : vector<128x162xbf16>, vector<162x32xbf16>, vector<128x32xf32> -> vector<128x32xf32>
    %c0_3 = arith.constant 0 : index
    %c0_4 = arith.constant 0 : index
    %3 = vector.load %arg3[%c0_3, %c0_4] : memref<1x32xf32, #tpu.memory_space<vmem>>, vector<1x32xf32>
    %4 = vector.broadcast %3 : vector<1x32xf32> to vector<128x32xf32>
    %5 = arith.mulf %2, %4 : vector<128x32xf32>
    %c0_5 = arith.constant 0 : index
    %c0_6 = arith.constant 0 : index
    %6 = vector.load %arg4[%c0_5, %c0_6] : memref<1x32xf32, #tpu.memory_space<vmem>>, vector<1x32xf32>
    %7 = vector.broadcast %6 : vector<1x32xf32> to vector<128x32xf32>
    %8 = arith.addf %5, %7 : vector<128x32xf32>
    %9 = arith.negf %8 : vector<128x32xf32>
    %10 = math.exp %9 : vector<128x32xf32>
    %cst_7 = arith.constant 1.000000e+00 : f32
    %11 = vector.broadcast %cst_7 : f32 to vector<128x32xf32>
    %12 = arith.addf %11, %10 : vector<128x32xf32>
    %13 = arith.divf %11, %12 : vector<128x32xf32>
    %14 = arith.mulf %8, %13 : vector<128x32xf32>
    %15 = arith.truncf %14 : vector<128x32xf32> to vector<128x32xbf16>
    %c0_8 = arith.constant 0 : index
    %c0_9 = arith.constant 0 : index
    %16 = vector.load %arg5[%c0_8, %c0_9] : memref<32x16xbf16, #tpu.memory_space<vmem>>, vector<32x16xbf16>
    %cst_10 = arith.constant dense<0.000000e+00> : vector<128x16xf32>
    %17 = tpu.matmul %15, %16, %cst_10 {dimension_numbers = #tpu.dot_dimension_numbers<[1], [0], [0], [1], [0, 0, 1, 1], [], []>} : vector<128x32xbf16>, vector<32x16xbf16>, vector<128x16xf32> -> vector<128x16xf32>
    %c0_11 = arith.constant 0 : index
    %c0_12 = arith.constant 0 : index
    %18 = vector.load %arg6[%c0_11, %c0_12] : memref<1x16xf32, #tpu.memory_space<vmem>>, vector<1x16xf32>
    %19 = vector.broadcast %18 : vector<1x16xf32> to vector<128x16xf32>
    %20 = arith.mulf %17, %19 : vector<128x16xf32>
    %c0_13 = arith.constant 0 : index
    %c0_14 = arith.constant 0 : index
    %21 = vector.load %arg7[%c0_13, %c0_14] : memref<1x16xf32, #tpu.memory_space<vmem>>, vector<1x16xf32>
    %22 = vector.broadcast %21 : vector<1x16xf32> to vector<128x16xf32>
    %23 = arith.addf %20, %22 : vector<128x16xf32>
    %cst_15 = arith.constant 0.000000e+00 : f32
    %24 = vector.broadcast %cst_15 : f32 to vector<128x16xf32>
    %25 = arith.cmpf ogt, %23, %24 : vector<128x16xf32>
    %cst_16 = arith.constant 1.000000e-01 : f32
    %26 = vector.broadcast %cst_16 : f32 to vector<128x16xf32>
    %27 = arith.mulf %26, %23 : vector<128x16xf32>
    %28 = arith.select %25, %23, %27 : vector<128x16xi1>, vector<128x16xf32>
    %29 = arith.truncf %28 : vector<128x16xf32> to vector<128x16xbf16>
    %c0_17 = arith.constant 0 : index
    %c0_18 = arith.constant 0 : index
    %30 = vector.load %arg8[%c0_17, %c0_18] : memref<128x16xbf16, #tpu.memory_space<vmem>>, vector<128x16xbf16>
    tpu.vector_store %arg8[%c0_17, %c0_18], %29 {strides = array<i32>} : memref<128x16xbf16, #tpu.memory_space<vmem>>, vector<128x16xbf16>,
    return
  }
  func.func @transform_0(%arg0: i32) -> (i32, i32) {
    %c0_i32 = arith.constant 0 : i32
    %c0_i32_0 = arith.constant 0 : i32
    return %arg0, %c0_i32 : i32, i32
  }
  func.func @transform_1(%arg0: i32) -> (i32, i32) {
    %c0_i32 = arith.constant 0 : i32
    %c0_i32_0 = arith.constant 0 : i32
    %c0_i32_1 = arith.constant 0 : i32
    return %c0_i32, %c0_i32_0 : i32, i32
  }
  func.func @transform_2(%arg0: i32) -> (i32, i32) {
    %c0_i32 = arith.constant 0 : i32
    %c0_i32_0 = arith.constant 0 : i32
    %c0_i32_1 = arith.constant 0 : i32
    return %c0_i32, %c0_i32_0 : i32, i32
  }
  func.func @transform_3(%arg0: i32) -> (i32, i32) {
    %c0_i32 = arith.constant 0 : i32
    %c0_i32_0 = arith.constant 0 : i32
    %c0_i32_1 = arith.constant 0 : i32
    return %c0_i32, %c0_i32_0 : i32, i32
  }
  func.func @transform_4(%arg0: i32) -> (i32, i32) {
    %c0_i32 = arith.constant 0 : i32
    %c0_i32_0 = arith.constant 0 : i32
    %c0_i32_1 = arith.constant 0 : i32
    return %c0_i32, %c0_i32_0 : i32, i32
  }
  func.func @transform_5(%arg0: i32) -> (i32, i32) {
    %c0_i32 = arith.constant 0 : i32
    %c0_i32_0 = arith.constant 0 : i32
    %c0_i32_1 = arith.constant 0 : i32
    return %c0_i32, %c0_i32_0 : i32, i32
  }
  func.func @transform_6(%arg0: i32) -> (i32, i32) {
    %c0_i32 = arith.constant 0 : i32
    %c0_i32_0 = arith.constant 0 : i32
    %c0_i32_1 = arith.constant 0 : i32
    return %c0_i32, %c0_i32_0 : i32, i32
  }
  func.func @transform_7(%arg0: i32) -> (i32, i32) {
    %c0_i32 = arith.constant 0 : i32
    %c0_i32_0 = arith.constant 0 : i32
    return %arg0, %c0_i32 : i32, i32
  }
}

</mosaic_0001>

<llo_original>
// kernel: tpu_custom_call.1
$region0: #{tpu_custom_call.1}
  #allocation0 [shape = 'u32[]', space=smem, size = 0x4, offset = 0x4, fixed_abs, tag = 'smem constant byte address 0x4 - core index']
  #allocation1 [shape = 'u32[144,128]{1,0:T(1,128)}', space=vmem, size = 0x12000, scoped, tag = 'internal scratch']
  %s0 = inlined_call_operand.vmem [shape: bf16[128,162], index: 0, kind: input, shape index: {}]
  %s1 = inlined_call_operand.vmem [shape: bf16[162,32], index: 1, kind: input, shape index: {}]
  %s2 = inlined_call_operand.vmem [shape: f32[1,32], index: 2, kind: input, shape index: {}]
  %s3 = inlined_call_operand.vmem [shape: f32[1,32], index: 3, kind: input, shape index: {}]
  %s4 = inlined_call_operand.vmem [shape: bf16[32,16], index: 4, kind: input, shape index: {}]
  %s5 = inlined_call_operand.vmem [shape: f32[1,16], index: 5, kind: input, shape index: {}]
  %s6 = inlined_call_operand.vmem [shape: f32[1,16], index: 6, kind: input, shape index: {}]
  %s7 = inlined_call_operand.vmem [shape: bf16[128,16], index: 7, kind: output, shape index: {}]
  %s8 = sld [smem:[#allocation0]]
  $region38: #{tpu_custom_call.1} parent=0
    _
  %s10 = ssub.s32 1, %s8
  %s11 = scalar_select 0, %s10, %s8
  // Predicated region
  $region2: #{tpu_custom_call.1} parent=0 // pred_check
    _
  $region3: #{tpu_custom_call.1} parent=0 // pred_check_branch
    %13 = sbr.rel (0) target = $region5
  $region4: #{tpu_custom_call.1} parent=0 // pred_region
    _
  $region5: #{tpu_custom_call.1} parent=0 // pred_fallthru
    _
  // Predicated region
  $region6: #{tpu_custom_call.1} parent=0 // pred_check
    _
  $region7: #{tpu_custom_call.1} parent=0 // pred_check_branch
    %15 = sbr.rel (0) target = $region9
  $region8: #{tpu_custom_call.1} parent=0 // pred_region
    _
  $region9: #{tpu_custom_call.1} parent=0 // pred_fallthru
    _
  // Predicated region
  $region10: #{tpu_custom_call.1} parent=0 // pred_check
    _
  $region11: #{tpu_custom_call.1} parent=0 // pred_check_branch
    %17 = sbr.rel (0) target = $region13
  $region12: #{tpu_custom_call.1} parent=0 // pred_region
    _
  $region13: #{tpu_custom_call.1} parent=0 // pred_fallthru
    _
  // Predicated region
  $region14: #{tpu_custom_call.1} parent=0 // pred_check
    _
  $region15: #{tpu_custom_call.1} parent=0 // pred_check_branch
    %19 = sbr.rel (0) target = $region17
  $region16: #{tpu_custom_call.1} parent=0 // pred_region
    _
  $region17: #{tpu_custom_call.1} parent=0 // pred_fallthru
    _
  // Predicated region
  $region18: #{tpu_custom_call.1} parent=0 // pred_check
    _
  $region19: #{tpu_custom_call.1} parent=0 // pred_check_branch
    %21 = sbr.rel (0) target = $region21
  $region20: #{tpu_custom_call.1} parent=0 // pred_region
    _
  $region21: #{tpu_custom_call.1} parent=0 // pred_fallthru
    _
  // Predicated region
  $region22: #{tpu_custom_call.1} parent=0 // pred_check
    _
  $region23: #{tpu_custom_call.1} parent=0 // pred_check_branch
    %23 = sbr.rel (0) target = $region25
  $region24: #{tpu_custom_call.1} parent=0 // pred_region
    _
  $region25: #{tpu_custom_call.1} parent=0 // pred_fallthru
    _
  // Predicated region
  $region26: #{tpu_custom_call.1} parent=0 // pred_check
    _
  $region27: #{tpu_custom_call.1} parent=0 // pred_check_branch
    %25 = sbr.rel (0) target = $region29
  $region28: #{tpu_custom_call.1} parent=0 // pred_region
    _
  $region29: #{tpu_custom_call.1} parent=0 // pred_fallthru
    _
  %v27 = vld [vmem:[%s0] sm:$0xff]
  %v28 = vld [vmem:[%s0 + $0x8] sm:$0xff]
  %v29 = vld [vmem:[%s0 + $0x10] sm:$0xff]
  %v30 = vld [vmem:[%s0 + $0x18] sm:$0xff]
  %v31 = vld [vmem:[%s0 + $0x20] sm:$0xff]
  %v32 = vld [vmem:[%s0 + $0x28] sm:$0xff]
  %v33 = vld [vmem:[%s0 + $0x30] sm:$0xff]
  %v34 = vld [vmem:[%s0 + $0x38] sm:$0xff]
  %v35 = vld [vmem:[%s0 + $0x40] sm:$0xff]
  %v36 = vld [vmem:[%s0 + $0x48] sm:$0xff]
  %v37 = vld [vmem:[%s0 + $0x50] sm:$0xff]
  %v38 = vld [vmem:[%s0 + $0x58] sm:$0xff]
  %v39 = vld [vmem:[%s0 + $0x60] sm:$0xff]
  %v40 = vld [vmem:[%s0 + $0x68] sm:$0xff]
  %v41 = vld [vmem:[%s0 + $0x70] sm:$0xff]
  %v42 = vld [vmem:[%s0 + $0x78] sm:$0xff]
  %v43 = vld [vmem:[%s1] sm:$0xf]
  %v44 = vld [vmem:[%s1 + $0x4] sm:$0xf]
  %v45 = vld [vmem:[%s1 + $0x8] sm:$0xf]
  %v46 = vld [vmem:[%s1 + $0xc] sm:$0xf]
  %v47 = vld [vmem:[%s1 + $0x10] sm:$0xf]
  %v48 = vld [vmem:[%s1 + $0x14] sm:$0xf]
  %v49 = vld [vmem:[%s1 + $0x18] sm:$0xf]
  %v50 = vld [vmem:[%s1 + $0x1c] sm:$0xf]
  %v51 = vld [vmem:[%s1 + $0x20] sm:$0xf]
  %v52 = vld [vmem:[%s1 + $0x24] sm:$0xf]
  %v53 = vld [vmem:[%s1 + $0x28] sm:$0xf]
  %v54 = vld [vmem:[%s1 + $0x2c] sm:$0xf]
  %v55 = vld [vmem:[%s1 + $0x30] sm:$0xf]
  %v56 = vld [vmem:[%s1 + $0x34] sm:$0xf]
  %v57 = vld [vmem:[%s1 + $0x38] sm:$0xf]
  %v58 = vld [vmem:[%s1 + $0x3c] sm:$0xf]
  %v59 = vld [vmem:[%s1 + $0x40] sm:$0xf]
  %v60 = vld [vmem:[%s1 + $0x44] sm:$0xf]
  %v61 = vld [vmem:[%s1 + $0x48] sm:$0xf]
  %v62 = vld [vmem:[%s1 + $0x4c] sm:$0xf]
  %v63 = vld [vmem:[%s1 + $0x50] sm:$0x1]
  %v80 = vunpack.c.l.b16 %v27
  %v81 = vunpack.c.h.b16 %v27
  %v82 = vunpack.c.l.b16 %v28
  %v83 = vunpack.c.h.b16 %v28
  %v84 = vunpack.c.l.b16 %v29
  %v85 = vunpack.c.h.b16 %v29
  %v86 = vunpack.c.l.b16 %v30
  %v87 = vunpack.c.h.b16 %v30
  %v88 = vunpack.c.l.b16 %v31
  %v89 = vunpack.c.h.b16 %v31
  %v90 = vunpack.c.l.b16 %v32
  %v91 = vunpack.c.h.b16 %v32
  %v92 = vunpack.c.l.b16 %v33
  %v93 = vunpack.c.h.b16 %v33
  %v94 = vunpack.c.l.b16 %v34
  %v95 = vunpack.c.h.b16 %v34
  %v96 = vunpack.c.l.b16 %v35
  %v97 = vunpack.c.h.b16 %v35
  %v98 = vunpack.c.l.b16 %v36
  %v99 = vunpack.c.h.b16 %v36
  %v100 = vunpack.c.l.b16 %v37
  %v101 = vunpack.c.h.b16 %v37
  %v102 = vunpack.c.l.b16 %v38
  %v103 = vunpack.c.h.b16 %v38
  %v104 = vunpack.c.l.b16 %v39
  %v105 = vunpack.c.h.b16 %v39
  %v106 = vunpack.c.l.b16 %v40
  %v107 = vunpack.c.h.b16 %v40
  %v108 = vunpack.c.l.b16 %v41
  %v109 = vunpack.c.h.b16 %v41
  %v110 = vunpack.c.l.b16 %v42
  %v111 = vunpack.c.h.b16 %v42
  %v112 = vpack.c.b16 %v82, %v80
  %v113 = vpack.c.b16 %v83, %v81
  %v114 = vpack.c.b16 %v86, %v84
  %v115 = vpack.c.b16 %v87, %v85
  %v116 = vpack.c.b16 %v90, %v88
  %v117 = vpack.c.b16 %v91, %v89
  %v118 = vpack.c.b16 %v94, %v92
  %v119 = vpack.c.b16 %v95, %v93
  %v120 = vpack.c.b16 %v98, %v96
  %v121 = vpack.c.b16 %v99, %v97
  %v122 = vpack.c.b16 %v102, %v100
  %v123 = vpack.c.b16 %v103, %v101
  %v124 = vpack.c.b16 %v106, %v104
  %v125 = vpack.c.b16 %v107, %v105
  %v126 = vpack.c.b16 %v110, %v108
  %v127 = vpack.c.b16 %v111, %v109
  %v157 = vunpack.c.l.b16 %v43
  %v158 = vunpack.c.l.b16 %v44
  %v159 = vunpack.c.l.b16 %v45
  %v160 = vunpack.c.l.b16 %v46
  %v161 = vunpack.c.l.b16 %v47
  %v162 = vunpack.c.l.b16 %v48
  %v163 = vunpack.c.l.b16 %v49
  %v164 = vunpack.c.l.b16 %v50
  %v165 = vunpack.c.l.b16 %v51
  %v166 = vunpack.c.l.b16 %v52
  %v167 = vunpack.c.l.b16 %v53
  %v168 = vunpack.c.l.b16 %v54
  %v169 = vunpack.c.l.b16 %v55
  %v170 = vunpack.c.l.b16 %v56
  %v171 = vunpack.c.l.b16 %v57
  %v172 = vunpack.c.l.b16 %v58
  %v173 = vunpack.c.l.b16 %v59
  %v174 = vunpack.c.l.b16 %v60
  %v175 = vunpack.c.l.b16 %v61
  %v176 = vunpack.c.l.b16 %v62
  %v177 = vunpack.c.l.b16 %v63
  %v178 = vpack.c.b16 %v158, %v157
  %v179 = vpack.c.b16 %v160, %v159
  %v180 = vpack.c.b16 %v162, %v161
  %v181 = vpack.c.b16 %v164, %v163
  %v182 = vpack.c.b16 %v166, %v165
  %v183 = vpack.c.b16 %v168, %v167
  %v184 = vpack.c.b16 %v170, %v169
  %v185 = vpack.c.b16 %v172, %v171
  %v186 = vpack.c.b16 %v174, %v173
  %v187 = vpack.c.b16 %v176, %v175
  %v188 = vpack.c.b16 %v177, %v177
  %vm199 = vcmask 277504
  %v201 = vsel %vm199, %v113, 0
  %v204 = vsel %vm199, %v115, 0
  %v207 = vsel %vm199, %v117, 0
  %v210 = vsel %vm199, %v119, 0
  %v213 = vsel %vm199, %v121, 0
  %v216 = vsel %vm199, %v123, 0
  %v219 = vsel %vm199, %v125, 0
  %v222 = vsel %vm199, %v127, 0
  %vm224 = vcmask 1040384
  %v226 = vsel %vm224, %v188, 0
  %228 = vmatprep.subr.bf16.mxu0 0
  %229 = vmatpush1.bf16.msra.mxu0 %v185
  %230 = vmatprep.subr.bf16.mxu0 0
  %231 = vmatpush1.bf16.msra.mxu0 %v184
  %232 = vmatprep.subr.bf16.mxu0 0
  %233 = vmatpush1.bf16.msra.mxu0 %v183
  %234 = vmatprep.subr.bf16.mxu0 0
  %235 = vmatpush1.bf16.msra.mxu0 %v182
  %236 = vmatprep.subr.bf16.mxu0 0
  %237 = vmatpush1.bf16.msra.mxu0 %v181
  %238 = vmatprep.subr.bf16.mxu0 0
  %239 = vmatpush1.bf16.msra.mxu0 %v180
  %240 = vmatprep.subr.bf16.mxu0 0
  %241 = vmatpush1.bf16.msra.mxu0 %v179
  %242 = vmatprep.subr.bf16.mxu0 0
  %243 = vmatpush1.bf16.msra.mxu0 %v178
  %244 = vmatprep.subr.bf16.mxu0 0
  %245 = vmatpush2.bf16.msra.mxu0 0
  %246 = vmatprep.subr.bf16.mxu0 0
  %247 = vmatpush2.bf16.msra.mxu0 0
  %248 = vmatprep.subr.bf16.mxu0 0
  %249 = vmatpush2.bf16.msra.mxu0 0
  %250 = vmatprep.subr.bf16.mxu0 0
  %251 = vmatpush2.bf16.msra.mxu0 0
  %252 = vmatprep.subr.bf16.mxu0 0
  %253 = vmatpush2.bf16.msra.mxu0 0
  %254 = vmatprep.subr.bf16.mxu0 0
  %255 = vmatpush2.bf16.msra.mxu0 %v226
  %256 = vmatprep.subr.bf16.mxu0 0
  %257 = vmatpush2.bf16.msra.mxu0 %v187
  %258 = vmatprep.subr.bf16.mxu0 0
  %259 = vmatpush2.bf16.msra.mxu0 %v186
  %260 = vmatprep.mubr.bf16.mxu0 %v201
  %261 = vmatmul.mubr.bf16.gmra.mxu0 %v112
  %v262 = vpop.f32.mrf.mxu0
  %v263 = vadd.f32 0.0, %v262
  %v264 = vpop.f32.mrf.mxu0
  %v265 = vpop.f32.mrf.mxu0
  %v266 = vadd.f32 0.0, %v265
  %v267 = vpop.f32.mrf.mxu0
  %268 = vmatprep.mubr.bf16.mxu0 %v204
  %269 = vmatmul.mubr.bf16.gmra.mxu0 %v114
  %v270 = vpop.f32.mrf.mxu0
  %v271 = vadd.f32 0.0, %v270
  %v272 = vpop.f32.mrf.mxu0
  %v273 = vpop.f32.mrf.mxu0
  %v274 = vadd.f32 0.0, %v273
  %v275 = vpop.f32.mrf.mxu0
  %276 = vmatprep.mubr.bf16.mxu0 %v207
  %277 = vmatmul.mubr.bf16.gmra.mxu0 %v116
  %v278 = vpop.f32.mrf.mxu0
  %v279 = vadd.f32 0.0, %v278
  %v280 = vpop.f32.mrf.mxu0
  %v281 = vpop.f32.mrf.mxu0
  %v282 = vadd.f32 0.0, %v281
  %v283 = vpop.f32.mrf.mxu0
  %284 = vmatprep.mubr.bf16.mxu0 %v210
  %285 = vmatmul.mubr.bf16.gmra.mxu0 %v118
  %v286 = vpop.f32.mrf.mxu0
  %v287 = vadd.f32 0.0, %v286
  %v288 = vpop.f32.mrf.mxu0
  %v289 = vpop.f32.mrf.mxu0
  %v290 = vadd.f32 0.0, %v289
  %v291 = vpop.f32.mrf.mxu0
  %292 = vmatprep.mubr.bf16.mxu0 %v213
  %293 = vmatmul.mubr.bf16.gmra.mxu0 %v120
  %v294 = vpop.f32.mrf.mxu0
  %v295 = vadd.f32 0.0, %v294
  %v296 = vpop.f32.mrf.mxu0
  %v297 = vpop.f32.mrf.mxu0
  %v298 = vadd.f32 0.0, %v297
  %v299 = vpop.f32.mrf.mxu0
  %300 = vmatprep.mubr.bf16.mxu0 %v216
  %301 = vmatmul.mubr.bf16.gmra.mxu0 %v122
  %v302 = vpop.f32.mrf.mxu0
  %v303 = vadd.f32 0.0, %v302
  %v304 = vpop.f32.mrf.mxu0
  %v305 = vpop.f32.mrf.mxu0
  %v306 = vadd.f32 0.0, %v305
  %v307 = vpop.f32.mrf.mxu0
  %308 = vmatprep.mubr.bf16.mxu0 %v219
  %309 = vmatmul.mubr.bf16.gmra.mxu0 %v124
  %v310 = vpop.f32.mrf.mxu0
  %v311 = vadd.f32 0.0, %v310
  %v312 = vpop.f32.mrf.mxu0
  %v313 = vpop.f32.mrf.mxu0
  %v314 = vadd.f32 0.0, %v313
  %v315 = vpop.f32.mrf.mxu0
  %316 = vmatprep.mubr.bf16.mxu0 %v222
  %317 = vmatmul.mubr.bf16.gmra.mxu0 %v126
  %v318 = vpop.f32.mrf.mxu0
  %v319 = vadd.f32 0.0, %v318
  %v320 = vpop.f32.mrf.mxu0
  %v321 = vpop.f32.mrf.mxu0
  %v322 = vadd.f32 0.0, %v321
  %v323 = vpop.f32.mrf.mxu0
  %324 = vdwg.mxu0
  %v325 = vld [vmem:[%s2] sm:$0x1]
  %v327 = vlaneseq
  %v328 = vshrl.u32 %v327, 7
  %v329 = vsub.s32 0, %v328
  %v330 = vrot.slane %v325, %v329
  %v332 = vmul.f32 %v263, %v330
  %v333 = vmul.f32 %v266, %v330
  %v334 = vmul.f32 %v271, %v330
  %v335 = vmul.f32 %v274, %v330
  %v336 = vmul.f32 %v279, %v330
  %v337 = vmul.f32 %v282, %v330
  %v338 = vmul.f32 %v287, %v330
  %v339 = vmul.f32 %v290, %v330
  %v340 = vmul.f32 %v295, %v330
  %v341 = vmul.f32 %v298, %v330
  %v342 = vmul.f32 %v303, %v330
  %v343 = vmul.f32 %v306, %v330
  %v344 = vmul.f32 %v311, %v330
  %v345 = vmul.f32 %v314, %v330
  %v346 = vmul.f32 %v319, %v330
  %v347 = vmul.f32 %v322, %v330
  %v348 = vld [vmem:[%s3] sm:$0x1]
  %v350 = vlaneseq
  %v351 = vshrl.u32 %v350, 7
  %v352 = vsub.s32 0, %v351
  %v353 = vrot.slane %v348, %v352
  %v355 = vadd.f32 %v332, %v353
  %v356 = vadd.f32 %v333, %v353
  %v357 = vadd.f32 %v334, %v353
  %v358 = vadd.f32 %v335, %v353
  %v359 = vadd.f32 %v336, %v353
  %v360 = vadd.f32 %v337, %v353
  %v361 = vadd.f32 %v338, %v353
  %v362 = vadd.f32 %v339, %v353
  %v363 = vadd.f32 %v340, %v353
  %v364 = vadd.f32 %v341, %v353
  %v365 = vadd.f32 %v342, %v353
  %v366 = vadd.f32 %v343, %v353
  %v367 = vadd.f32 %v344, %v353
  %v368 = vadd.f32 %v345, %v353
  %v369 = vadd.f32 %v346, %v353
  %v370 = vadd.f32 %v347, %v353
  %v371 = vxor.u32 %v355, 2147483648
  %v372 = vxor.u32 %v356, 2147483648
  %v373 = vxor.u32 %v357, 2147483648
  %v374 = vxor.u32 %v358, 2147483648
  %v375 = vxor.u32 %v359, 2147483648
  %v376 = vxor.u32 %v360, 2147483648
  %v377 = vxor.u32 %v361, 2147483648
  %v378 = vxor.u32 %v362, 2147483648
  %v379 = vxor.u32 %v363, 2147483648
  %v380 = vxor.u32 %v364, 2147483648
  %v381 = vxor.u32 %v365, 2147483648
  %v382 = vxor.u32 %v366, 2147483648
  %v383 = vxor.u32 %v367, 2147483648
  %v384 = vxor.u32 %v368, 2147483648
  %v385 = vxor.u32 %v369, 2147483648
  %v386 = vxor.u32 %v370, 2147483648
  %v387 = vmul.f32 %v371, 1.442695
  %v388 = vpow.pop %v387
  %v389 = vmul.f32 %v372, 1.442695
  %v390 = vpow.pop %v389
  %v391 = vmul.f32 %v373, 1.442695
  %v392 = vpow.pop %v391
  %v393 = vmul.f32 %v374, 1.442695
  %v394 = vpow.pop %v393
  %v395 = vmul.f32 %v375, 1.442695
  %v396 = vpow.pop %v395
  %v397 = vmul.f32 %v376, 1.442695
  %v398 = vpow.pop %v397
  %v399 = vmul.f32 %v377, 1.442695
  %v400 = vpow.pop %v399
  %v401 = vmul.f32 %v378, 1.442695
  %v402 = vpow.pop %v401
  %v403 = vmul.f32 %v379, 1.442695
  %v404 = vpow.pop %v403
  %v405 = vmul.f32 %v380, 1.442695
  %v406 = vpow.pop %v405
  %v407 = vmul.f32 %v381, 1.442695
  %v408 = vpow.pop %v407
  %v409 = vmul.f32 %v382, 1.442695
  %v410 = vpow.pop %v409
  %v411 = vmul.f32 %v383, 1.442695
  %v412 = vpow.pop %v411
  %v413 = vmul.f32 %v384, 1.442695
  %v414 = vpow.pop %v413
  %v415 = vmul.f32 %v385, 1.442695
  %v416 = vpow.pop %v415
  %v417 = vmul.f32 %v386, 1.442695
  %v418 = vpow.pop %v417
  %v419 = vadd.f32 %v388, 1.0
  %v420 = vadd.f32 %v390, 1.0
  %v421 = vadd.f32 %v392, 1.0
  %v422 = vadd.f32 %v394, 1.0
  %v423 = vadd.f32 %v396, 1.0
  %v424 = vadd.f32 %v398, 1.0
  %v425 = vadd.f32 %v400, 1.0
  %v426 = vadd.f32 %v402, 1.0
  %v427 = vadd.f32 %v404, 1.0
  %v428 = vadd.f32 %v406, 1.0
  %v429 = vadd.f32 %v408, 1.0
  %v430 = vadd.f32 %v410, 1.0
  %v431 = vadd.f32 %v412, 1.0
  %v432 = vadd.f32 %v414, 1.0
  %v433 = vadd.f32 %v416, 1.0
  %v434 = vadd.f32 %v418, 1.0
  %v435 = vrcp.pop %v419
  %v436 = vmul.f32 1.0, %v435
  %v437 = vrcp.pop %v420
  %v438 = vmul.f32 1.0, %v437
  %v439 = vrcp.pop %v421
  %v440 = vmul.f32 1.0, %v439
  %v441 = vrcp.pop %v422
  %v442 = vmul.f32 1.0, %v441
  %v443 = vrcp.pop %v423
  %v444 = vmul.f32 1.0, %v443
  %v445 = vrcp.pop %v424
  %v446 = vmul.f32 1.0, %v445
  %v447 = vrcp.pop %v425
  %v448 = vmul.f32 1.0, %v447
  %v449 = vrcp.pop %v426
  %v450 = vmul.f32 1.0, %v449
  %v451 = vrcp.pop %v427
  %v452 = vmul.f32 1.0, %v451
  %v453 = vrcp.pop %v428
  %v454 = vmul.f32 1.0, %v453
  %v455 = vrcp.pop %v429
  %v456 = vmul.f32 1.0, %v455
  %v457 = vrcp.pop %v430
  %v458 = vmul.f32 1.0, %v457
  %v459 = vrcp.pop %v431
  %v460 = vmul.f32 1.0, %v459
  %v461 = vrcp.pop %v432
  %v462 = vmul.f32 1.0, %v461
  %v463 = vrcp.pop %v433
  %v464 = vmul.f32 1.0, %v463
  %v465 = vrcp.pop %v434
  %v466 = vmul.f32 1.0, %v465
  %v467 = vmul.f32 %v355, %v436
  %v468 = vmul.f32 %v356, %v438
  %v469 = vmul.f32 %v357, %v440
  %v470 = vmul.f32 %v358, %v442
  %v471 = vmul.f32 %v359, %v444
  %v472 = vmul.f32 %v360, %v446
  %v473 = vmul.f32 %v361, %v448
  %v474 = vmul.f32 %v362, %v450
  %v475 = vmul.f32 %v363, %v452
  %v476 = vmul.f32 %v364, %v454
  %v477 = vmul.f32 %v365, %v456
  %v478 = vmul.f32 %v366, %v458
  %v479 = vmul.f32 %v367, %v460
  %v480 = vmul.f32 %v368, %v462
  %v481 = vmul.f32 %v369, %v464
  %v482 = vmul.f32 %v370, %v466
  %v483 = vpack.c.bf16 %v468, %v467
  %v484 = vpack.c.bf16 %v470, %v469
  %v485 = vpack.c.bf16 %v472, %v471
  %v486 = vpack.c.bf16 %v474, %v473
  %v487 = vpack.c.bf16 %v476, %v475
  %v488 = vpack.c.bf16 %v478, %v477
  %v489 = vpack.c.bf16 %v480, %v479
  %v490 = vpack.c.bf16 %v482, %v481
  %v491 = vld [vmem:[%s4] sm:$0xf]
  %v492 = vld [vmem:[%s4 + $0x4] sm:$0xf]
  %v493 = vld [vmem:[%s4 + $0x8] sm:$0xf]
  %v494 = vld [vmem:[%s4 + $0xc] sm:$0xf]
  %v499 = vunpack.c.l.b16 %v491
  %v500 = vunpack.c.l.b16 %v492
  %v501 = vunpack.c.l.b16 %v493
  %v502 = vunpack.c.l.b16 %v494
  %v503 = vpack.c.b16 %v500, %v499
  %v504 = vpack.c.b16 %v502, %v501
  %vm507 = vcmask 261120
  %v509 = vsel %vm507, %v483, 0
  %v512 = vsel %vm507, %v484, 0
  %v515 = vsel %vm507, %v485, 0
  %v518 = vsel %vm507, %v486, 0
  %v521 = vsel %vm507, %v487, 0
  %v524 = vsel %vm507, %v488, 0
  %v527 = vsel %vm507, %v489, 0
  %v530 = vsel %vm507, %v490, 0
  %532 = vmatprep.subr.bf16.mxu0 0
  %533 = vmatpush1.bf16.msra.mxu0 0
  %534 = vmatprep.subr.bf16.mxu0 0
  %535 = vmatpush1.bf16.msra.mxu0 0
  %536 = vmatprep.subr.bf16.mxu0 0
  %537 = vmatpush1.bf16.msra.mxu0 0
  %538 = vmatprep.subr.bf16.mxu0 0
  %539 = vmatpush1.bf16.msra.mxu0 0
  %540 = vmatprep.subr.bf16.mxu0 0
  %541 = vmatpush1.bf16.msra.mxu0 0
  %542 = vmatprep.subr.bf16.mxu0 0
  %543 = vmatpush1.bf16.msra.mxu0 0
  %544 = vmatprep.subr.bf16.mxu0 0
  %545 = vmatpush1.bf16.msra.mxu0 %v504
  %546 = vmatprep.subr.bf16.mxu0 0
  %547 = vmatpush1.bf16.msra.mxu0 %v503
  %548 = vmatprep.subr.bf16.mxu0 0
  %549 = vmatpush2.bf16.msra.mxu0 0
  %550 = vmatprep.subr.bf16.mxu0 0
  %551 = vmatpush2.bf16.msra.mxu0 0
  %552 = vmatprep.subr.bf16.mxu0 0
  %553 = vmatpush2.bf16.msra.mxu0 0
  %554 = vmatprep.subr.bf16.mxu0 0
  %555 = vmatpush2.bf16.msra.mxu0 0
  %556 = vmatprep.subr.bf16.mxu0 0
  %557 = vmatpush2.bf16.msra.mxu0 0
  %558 = vmatprep.subr.bf16.mxu0 0
  %559 = vmatpush2.bf16.msra.mxu0 0
  %560 = vmatprep.subr.bf16.mxu0 0
  %561 = vmatpush2.bf16.msra.mxu0 0
  %562 = vmatprep.subr.bf16.mxu0 0
  %563 = vmatpush2.bf16.msra.mxu0 0
  %564 = vmatprep.mubr.bf16.mxu0 0
  %565 = vmatmul.mubr.bf16.gmra.mxu0 %v509
  %v566 = vpop.f32.mrf.mxu0
  %v567 = vadd.f32 0.0, %v566
  %v568 = vpop.f32.mrf.mxu0
  %v569 = vpop.f32.mrf.mxu0
  %v570 = vadd.f32 0.0, %v569
  %v571 = vpop.f32.mrf.mxu0
  %572 = vmatprep.mubr.bf16.mxu0 0
  %573 = vmatmul.mubr.bf16.gmra.mxu0 %v512
  %v574 = vpop.f32.mrf.mxu0
  %v575 = vadd.f32 0.0, %v574
  %v576 = vpop.f32.mrf.mxu0
  %v577 = vpop.f32.mrf.mxu0
  %v578 = vadd.f32 0.0, %v577
  %v579 = vpop.f32.mrf.mxu0
  %580 = vmatprep.mubr.bf16.mxu0 0
  %581 = vmatmul.mubr.bf16.gmra.mxu0 %v515
  %v582 = vpop.f32.mrf.mxu0
  %v583 = vadd.f32 0.0, %v582
  %v584 = vpop.f32.mrf.mxu0
  %v585 = vpop.f32.mrf.mxu0
  %v586 = vadd.f32 0.0, %v585
  %v587 = vpop.f32.mrf.mxu0
  %588 = vmatprep.mubr.bf16.mxu0 0
  %589 = vmatmul.mubr.bf16.gmra.mxu0 %v518
  %v590 = vpop.f32.mrf.mxu0
  %v591 = vadd.f32 0.0, %v590
  %v592 = vpop.f32.mrf.mxu0
  %v593 = vpop.f32.mrf.mxu0
  %v594 = vadd.f32 0.0, %v593
  %v595 = vpop.f32.mrf.mxu0
  %596 = vmatprep.mubr.bf16.mxu0 0
  %597 = vmatmul.mubr.bf16.gmra.mxu0 %v521
  %v598 = vpop.f32.mrf.mxu0
  %v599 = vadd.f32 0.0, %v598
  %v600 = vpop.f32.mrf.mxu0
  %v601 = vpop.f32.mrf.mxu0
  %v602 = vadd.f32 0.0, %v601
  %v603 = vpop.f32.mrf.mxu0
  %604 = vmatprep.mubr.bf16.mxu0 0
  %605 = vmatmul.mubr.bf16.gmra.mxu0 %v524
  %v606 = vpop.f32.mrf.mxu0
  %v607 = vadd.f32 0.0, %v606
  %v608 = vpop.f32.mrf.mxu0
  %v609 = vpop.f32.mrf.mxu0
  %v610 = vadd.f32 0.0, %v609
  %v611 = vpop.f32.mrf.mxu0
  %612 = vmatprep.mubr.bf16.mxu0 0
  %613 = vmatmul.mubr.bf16.gmra.mxu0 %v527
  %v614 = vpop.f32.mrf.mxu0
  %v615 = vadd.f32 0.0, %v614
  %v616 = vpop.f32.mrf.mxu0
  %v617 = vpop.f32.mrf.mxu0
  %v618 = vadd.f32 0.0, %v617
  %v619 = vpop.f32.mrf.mxu0
  %620 = vmatprep.mubr.bf16.mxu0 0
  %621 = vmatmul.mubr.bf16.gmra.mxu0 %v530
  %v622 = vpop.f32.mrf.mxu0
  %v623 = vadd.f32 0.0, %v622
  %v624 = vpop.f32.mrf.mxu0
  %v625 = vpop.f32.mrf.mxu0
  %v626 = vadd.f32 0.0, %v625
  %v627 = vpop.f32.mrf.mxu0
  %628 = vdwg.mxu0
  %v629 = vld [vmem:[%s5] sm:$0x1]
  %v631 = vlaneseq
  %v632 = vshrl.u32 %v631, 7
  %v633 = vsub.s32 0, %v632
  %v634 = vrot.slane %v629, %v633
  %v636 = vmul.f32 %v567, %v634
  %v637 = vmul.f32 %v570, %v634
  %v638 = vmul.f32 %v575, %v634
  %v639 = vmul.f32 %v578, %v634
  %v640 = vmul.f32 %v583, %v634
  %v641 = vmul.f32 %v586, %v634
  %v642 = vmul.f32 %v591, %v634
  %v643 = vmul.f32 %v594, %v634
  %v644 = vmul.f32 %v599, %v634
  %v645 = vmul.f32 %v602, %v634
  %v646 = vmul.f32 %v607, %v634
  %v647 = vmul.f32 %v610, %v634
  %v648 = vmul.f32 %v615, %v634
  %v649 = vmul.f32 %v618, %v634
  %v650 = vmul.f32 %v623, %v634
  %v651 = vmul.f32 %v626, %v634
  %v652 = vld [vmem:[%s6] sm:$0x1]
  %v654 = vlaneseq
  %v655 = vshrl.u32 %v654, 7
  %v656 = vsub.s32 0, %v655
  %v657 = vrot.slane %v652, %v656
  %v659 = vadd.f32 %v636, %v657
  %v660 = vadd.f32 %v637, %v657
  %v661 = vadd.f32 %v638, %v657
  %v662 = vadd.f32 %v639, %v657
  %v663 = vadd.f32 %v640, %v657
  %v664 = vadd.f32 %v641, %v657
  %v665 = vadd.f32 %v642, %v657
  %v666 = vadd.f32 %v643, %v657
  %v667 = vadd.f32 %v644, %v657
  %v668 = vadd.f32 %v645, %v657
  %v669 = vadd.f32 %v646, %v657
  %v670 = vadd.f32 %v647, %v657
  %v671 = vadd.f32 %v648, %v657
  %v672 = vadd.f32 %v649, %v657
  %v673 = vadd.f32 %v650, %v657
  %v674 = vadd.f32 %v651, %v657
  %vm675 = vcmp.gt.f32.partialorder %v659, 0.0
  %vm676 = vcmp.gt.f32.partialorder %v660, 0.0
  %vm677 = vcmp.gt.f32.partialorder %v661, 0.0
  %vm678 = vcmp.gt.f32.partialorder %v662, 0.0
  %vm679 = vcmp.gt.f32.partialorder %v663, 0.0
  %vm680 = vcmp.gt.f32.partialorder %v664, 0.0
  %vm681 = vcmp.gt.f32.partialorder %v665, 0.0
  %vm682 = vcmp.gt.f32.partialorder %v666, 0.0
  %vm683 = vcmp.gt.f32.partialorder %v667, 0.0
  %vm684 = vcmp.gt.f32.partialorder %v668, 0.0
  %vm685 = vcmp.gt.f32.partialorder %v669, 0.0
  %vm686 = vcmp.gt.f32.partialorder %v670, 0.0
  %vm687 = vcmp.gt.f32.partialorder %v671, 0.0
  %vm688 = vcmp.gt.f32.partialorder %v672, 0.0
  %vm689 = vcmp.gt.f32.partialorder %v673, 0.0
  %vm690 = vcmp.gt.f32.partialorder %v674, 0.0
  %v691 = vmul.f32 %v659, 0.1
  %v692 = vmul.f32 %v660, 0.1
  %v693 = vmul.f32 %v661, 0.1
  %v694 = vmul.f32 %v662, 0.1
  %v695 = vmul.f32 %v663, 0.1
  %v696 = vmul.f32 %v664, 0.1
  %v697 = vmul.f32 %v665, 0.1
  %v698 = vmul.f32 %v666, 0.1
  %v699 = vmul.f32 %v667, 0.1
  %v700 = vmul.f32 %v668, 0.1
  %v701 = vmul.f32 %v669, 0.1
  %v702 = vmul.f32 %v670, 0.1
  %v703 = vmul.f32 %v671, 0.1
  %v704 = vmul.f32 %v672, 0.1
  %v705 = vmul.f32 %v673, 0.1
  %v706 = vmul.f32 %v674, 0.1
  %v707 = vsel %vm675, %v659, %v691
  %v708 = vsel %vm676, %v660, %v692
  %v709 = vsel %vm677, %v661, %v693
  %v710 = vsel %vm678, %v662, %v694
  %v711 = vsel %vm679, %v663, %v695
  %v712 = vsel %vm680, %v664, %v696
  %v713 = vsel %vm681, %v665, %v697
  %v714 = vsel %vm682, %v666, %v698
  %v715 = vsel %vm683, %v667, %v699
  %v716 = vsel %vm684, %v668, %v700
  %v717 = vsel %vm685, %v669, %v701
  %v718 = vsel %vm686, %v670, %v702
  %v719 = vsel %vm687, %v671, %v703
  %v720 = vsel %vm688, %v672, %v704
  %v721 = vsel %vm689, %v673, %v705
  %v722 = vsel %vm690, %v674, %v706
  %v723 = vpack.c.bf16 %v708, %v707
  %v724 = vpack.c.bf16 %v710, %v709
  %v725 = vpack.c.bf16 %v712, %v711
  %v726 = vpack.c.bf16 %v714, %v713
  %v727 = vpack.c.bf16 %v716, %v715
  %v728 = vpack.c.bf16 %v718, %v717
  %v729 = vpack.c.bf16 %v720, %v719
  %v730 = vpack.c.bf16 %v722, %v721
  %v739 = vunpack.c.l.b16 %v723
  %v740 = vunpack.c.h.b16 %v723
  %v741 = vunpack.c.l.b16 %v724
  %v742 = vunpack.c.h.b16 %v724
  %v743 = vunpack.c.l.b16 %v725
  %v744 = vunpack.c.h.b16 %v725
  %v745 = vunpack.c.l.b16 %v726
  %v746 = vunpack.c.h.b16 %v726
  %v747 = vunpack.c.l.b16 %v727
  %v748 = vunpack.c.h.b16 %v727
  %v749 = vunpack.c.l.b16 %v728
  %v750 = vunpack.c.h.b16 %v728
  %v751 = vunpack.c.l.b16 %v729
  %v752 = vunpack.c.h.b16 %v729
  %v753 = vunpack.c.l.b16 %v730
  %v754 = vunpack.c.h.b16 %v730
  %v755 = vpack.c.b16 %v739, %v739
  %v756 = vpack.c.b16 %v740, %v740
  %v757 = vpack.c.b16 %v741, %v741
  %v758 = vpack.c.b16 %v742, %v742
  %v759 = vpack.c.b16 %v743, %v743
  %v760 = vpack.c.b16 %v744, %v744
  %v761 = vpack.c.b16 %v745, %v745
  %v762 = vpack.c.b16 %v746, %v746
  %v763 = vpack.c.b16 %v747, %v747
  %v764 = vpack.c.b16 %v748, %v748
  %v765 = vpack.c.b16 %v749, %v749
  %v766 = vpack.c.b16 %v750, %v750
  %v767 = vpack.c.b16 %v751, %v751
  %v768 = vpack.c.b16 %v752, %v752
  %v769 = vpack.c.b16 %v753, %v753
  %v770 = vpack.c.b16 %v754, %v754
  %vm787 = vcmask 125952
  %788 = vst.msk [vmem:[%s7] sm:$0xf] %vm787, %v755
  %789 = vst.msk [vmem:[%s7 + $0x4] sm:$0xf] %vm787, %v756
  %790 = vst.msk [vmem:[%s7 + $0x8] sm:$0xf] %vm787, %v757
  %791 = vst.msk [vmem:[%s7 + $0xc] sm:$0xf] %vm787, %v758
  %792 = vst.msk [vmem:[%s7 + $0x10] sm:$0xf] %vm787, %v759
  %793 = vst.msk [vmem:[%s7 + $0x14] sm:$0xf] %vm787, %v760
  %794 = vst.msk [vmem:[%s7 + $0x18] sm:$0xf] %vm787, %v761
  %795 = vst.msk [vmem:[%s7 + $0x1c] sm:$0xf] %vm787, %v762
  %796 = vst.msk [vmem:[%s7 + $0x20] sm:$0xf] %vm787, %v763
  %797 = vst.msk [vmem:[%s7 + $0x24] sm:$0xf] %vm787, %v764
  %798 = vst.msk [vmem:[%s7 + $0x28] sm:$0xf] %vm787, %v765
  %799 = vst.msk [vmem:[%s7 + $0x2c] sm:$0xf] %vm787, %v766
  %800 = vst.msk [vmem:[%s7 + $0x30] sm:$0xf] %vm787, %v767
  %801 = vst.msk [vmem:[%s7 + $0x34] sm:$0xf] %vm787, %v768
  %802 = vst.msk [vmem:[%s7 + $0x38] sm:$0xf] %vm787, %v769
  %803 = vst.msk [vmem:[%s7 + $0x3c] sm:$0xf] %vm787, %v770
  // Predicated region
  $region30: #{tpu_custom_call.1} parent=0 // pred_check
    _
  $region31: #{tpu_custom_call.1} parent=0 // pred_check_branch
    %805 = sbr.rel (0) target = $region33
  $region32: #{tpu_custom_call.1} parent=0 // pred_region
    _
  $region33: #{tpu_custom_call.1} parent=0 // pred_fallthru
    _
  // Predicated region
  $region34: #{tpu_custom_call.1} parent=0 // pred_check
    _
  $region35: #{tpu_custom_call.1} parent=0 // pred_check_branch
    %807 = sbr.rel (0) target = $region37
  $region36: #{tpu_custom_call.1} parent=0 // pred_region
    _
  $region37: #{tpu_custom_call.1} parent=0 // pred_fallthru
    _

</llo_original>
